<compile_context>
chip_gen: v6e
topology: v6e:2x2x1
jax: 0.10.0
libtpu: 0.0.40
codegen_flags: <defaults>
</compile_context>

<pallas_src>
import functools

import jax
import jax.numpy as jnp
from jax import lax
from jax.experimental import pallas as pl
from jax.experimental.pallas import tpu as pltpu

_LANE = 1024        # lane-dense width (multiple of 128)
_TILE_ROWS = 512    # 512 x 1024 f32 = 2 MiB per block


def _round_up(x, m):
    return ((x + m - 1) // m) * m


def _fmix32(h):
    """murmur3 32-bit finalizer (uint32 -> uint32), VPU-only."""
    h = h ^ (h >> 16)
    h = h * jnp.uint32(0x85EBCA6B)
    h = h ^ (h >> 13)
    h = h * jnp.uint32(0xC2B2AE35)
    h = h ^ (h >> 16)
    return h


def _uniform01(idx_i32, seed_i32):
    """Per-element uniform in the open interval (0, 1) from hash(seed, idx)."""
    h = idx_i32.astype(jnp.uint32)
    h = h ^ (seed_i32.astype(jnp.uint32) * jnp.uint32(0x9E3779B1))
    h = _fmix32(h)
    h = _fmix32(h ^ jnp.uint32(0x7FEB352D))
    bits24 = (h >> 8).astype(jnp.int32)              # top 24 bits
    return (bits24.astype(jnp.float32) + 0.5) * (1.0 / 16777216.0)


# Acklam's rational approximation of the inverse normal CDF (|err| < 1.2e-8).
_A = (-3.969683028665376e+01, 2.209460984245205e+02, -2.759285104469687e+02,
      1.383577518672690e+02, -3.066479806614716e+01, 2.506628277459239e+00)
_B = (-5.447609879822406e+01, 1.615858368580409e+02, -1.556989798598866e+02,
      6.680131188771972e+01, -1.328068155288572e+01)
_C = (-7.784894002430293e-03, -3.223964580411365e-01, -2.400758277161838e+00,
      -2.549732539343734e+00, 4.374664141464968e+00, 2.938163982698783e+00)
_D = (7.784695709041462e-03, 3.224671290700398e-01, 2.445134137142996e+00,
      3.754408661907416e+00)
_P_LOW = 0.02425


def _std_normal_from_uniform(p):
    """Inverse-CDF transform: p ~ U(0,1) -> N(0,1). Branchless (jnp.where)."""
    q = p - 0.5
    r = q * q
    num = ((((_A[0] * r + _A[1]) * r + _A[2]) * r + _A[3]) * r + _A[4]) * r + _A[5]
    den = ((((_B[0] * r + _B[1]) * r + _B[2]) * r + _B[3]) * r + _B[4]) * r + 1.0
    x_central = num * q / den
    # Tails: share a single log/sqrt via pt = min(p, 1-p).
    pt = jnp.minimum(p, 1.0 - p)
    qt = jnp.sqrt(-2.0 * jnp.log(pt))
    num_t = ((((_C[0] * qt + _C[1]) * qt + _C[2]) * qt + _C[3]) * qt + _C[4]) * qt + _C[5]
    den_t = (((_D[0] * qt + _D[1]) * qt + _D[2]) * qt + _D[3]) * qt + 1.0
    x_tail = num_t / den_t
    x_tail = jnp.where(p < 0.5, x_tail, -x_tail)
    return jnp.where(pt < _P_LOW, x_tail, x_central)


def _cgd_kernel(seed_ref, x_ref, o_ref, *, alpha):
    tm, lane = x_ref.shape
    i = pl.program_id(0)
    # Global flat element index of every element in this tile (tiling-invariant).
    row = lax.broadcasted_iota(jnp.int32, (tm, lane), 0)
    col = lax.broadcasted_iota(jnp.int32, (tm, lane), 1)
    idx = (i * tm + row) * lane + col
    p = _uniform01(idx, seed_ref[0])
    eps = _std_normal_from_uniform(p)                 # f32 ~ N(0, 1)
    xv = x_ref[...].astype(jnp.float32)
    o_ref[...] = (xv * (1.0 + alpha * eps)).astype(o_ref.dtype)


def coupled_gaussian_dropout(x, seed, alpha=1.0, *, min_pallas_bytes=0,
                             tile_rows=_TILE_ROWS, lane=_LANE):
    """out = x * (1 + alpha * N(0,1)), elementwise. x: any shape (e.g. NCHW)."""
    orig_shape = x.shape
    orig_dtype = x.dtype
    total = x.size

    # Small-input fast path (review): kernel launch overhead dwarfs the work
    # below a few hundred KiB.  Disabled by default so the Pallas path runs.
    if total * x.dtype.itemsize < min_pallas_bytes:
        eps = jax.random.normal(jax.random.PRNGKey(seed), x.shape, jnp.float32)
        return (x.astype(jnp.float32) * (1.0 + alpha * eps)).astype(orig_dtype)

    # Flatten + pad to a lane-dense (rows_padded, lane) slab, lane = 8*128.
    rows = pl.cdiv(total, lane)
    tm = min(tile_rows, _round_up(rows, 8))           # tile rows, multiple of 8
    rows_padded = _round_up(rows, tm)
    padded_total = rows_padded * lane

    x_flat = x.reshape(-1)
    if padded_total != total:
        x_flat = jnp.pad(x_flat, (0, padded_total - total))
    x2 = x_flat.reshape(rows_padded, lane)

    seed_arr = jnp.asarray([seed], dtype=jnp.int32)

    out2 = pl.pallas_call(
        functools.partial(_cgd_kernel, alpha=float(alpha)),
        out_shape=jax.ShapeDtypeStruct(x2.shape, x2.dtype),
        grid_spec=pltpu.PrefetchScalarGridSpec(
            num_scalar_prefetch=1,                    # seed lives in SMEM
            grid=(rows_padded // tm,),
            in_specs=[pl.BlockSpec((tm, lane), lambda i, sref: (i, 0))],
            out_specs=pl.BlockSpec((tm, lane), lambda i, sref: (i, 0)),
        ),
        compiler_params=pltpu.CompilerParams(
            dimension_semantics=("parallel",),        # v7x: split tiles over 2 TCs
            vmem_limit_bytes=32 * 1024 * 1024,        # 2-deep in+out buffers << 32 MiB
        ),
        # TODO(synk): pass input_output_aliases={1: 0} if in-place update of the
        # activation buffer is acceptable (footprint win only, not bandwidth).
    )(seed_arr, x2)

    out_flat = out2.reshape(-1)
    if padded_total != total:
        out_flat = out_flat[:total]
    return out_flat.reshape(orig_shape).astype(orig_dtype)


if __name__ == "__main__":
    key = jax.random.PRNGKey(0)
    x = jax.random.normal(key, (2, 4, 16, 16), dtype=jnp.float32)

    out = coupled_gaussian_dropout(x, seed=0, alpha=1.0)
    out = jax.block_until_ready(out)

    assert out.shape == x.shape and out.dtype == x.dtype
    assert bool(jnp.isfinite(out).all())

    # Sanity: implied noise factor out/x = 1 + alpha*eps should have mean ~1
    # and std ~alpha (=1) over 2048 samples.
    ratio = out / jnp.where(jnp.abs(x) > 1e-6, x, 1.0)
    assert abs(float(jnp.mean(ratio)) - 1.0) < 0.2
    assert abs(float(jnp.std(ratio)) - 1.0) < 0.35

    print("KERNEL_OK")
</pallas_src>

<mosaic_0001>
module attributes {stable_mosaic.version = 11 : i64} {
  func.func @_cgd_kernel(%arg0: i32, %arg1: memref<1xi32, #tpu.memory_space<smem>>, %arg2: memref<8x1024xf32, #tpu.memory_space<vmem>>, %arg3: memref<8x1024xf32, #tpu.memory_space<vmem>>) attributes {dimension_semantics = [#tpu.dimension_semantics<parallel>], iteration_bounds = array<i64: 1>, scalar_prefetch = 1 : i64, scratch_operands = 0 : i64, tpu.core_type = #tpu.core_type<tc>, window_params = [{transform_indices = @transform_0, window_bounds = array<i64: 8, 1024>}, {transform_indices = @transform_1, window_bounds = array<i64: 8, 1024>}]} {
    %0 = tpu.iota {dimensions = array<i32: 0>} : vector<8x1024xi32>
    %1 = tpu.iota {dimensions = array<i32: 1>} : vector<8x1024xi32>
    %c8_i32 = arith.constant 8 : i32
    %2 = arith.muli %arg0, %c8_i32 : i32
    %3 = vector.broadcast %2 : i32 to vector<8x1024xi32>
    %4 = arith.addi %3, %0 : vector<8x1024xi32>
    %c1024_i32 = arith.constant 1024 : i32
    %5 = vector.broadcast %c1024_i32 : i32 to vector<8x1024xi32>
    %6 = arith.muli %4, %5 : vector<8x1024xi32>
    %7 = arith.addi %6, %1 : vector<8x1024xi32>
    %c0 = arith.constant 0 : index
    %8 = memref.load %arg1[%c0] : memref<1xi32, #tpu.memory_space<smem>>
    %c-1640531535_i32 = arith.constant -1640531535 : i32
    %9 = arith.muli %8, %c-1640531535_i32 : i32
    %10 = vector.broadcast %9 : i32 to vector<8x1024xi32>
    %11 = arith.xori %7, %10 : vector<8x1024xi32>
    %c16_i32 = arith.constant 16 : i32
    %12 = vector.broadcast %c16_i32 : i32 to vector<8x1024xi32>
    %13 = arith.shrui %11, %12 : vector<8x1024xi32>
    %14 = arith.xori %11, %13 : vector<8x1024xi32>
    %c-2048144789_i32 = arith.constant -2048144789 : i32
    %15 = vector.broadcast %c-2048144789_i32 : i32 to vector<8x1024xi32>
    %16 = arith.muli %14, %15 : vector<8x1024xi32>
    %c13_i32 = arith.constant 13 : i32
    %17 = vector.broadcast %c13_i32 : i32 to vector<8x1024xi32>
    %18 = arith.shrui %16, %17 : vector<8x1024xi32>
    %19 = arith.xori %16, %18 : vector<8x1024xi32>
    %c-1028477387_i32 = arith.constant -1028477387 : i32
    %20 = vector.broadcast %c-1028477387_i32 : i32 to vector<8x1024xi32>
    %21 = arith.muli %19, %20 : vector<8x1024xi32>
    %c16_i32_0 = arith.constant 16 : i32
    %22 = vector.broadcast %c16_i32_0 : i32 to vector<8x1024xi32>
    %23 = arith.shrui %21, %22 : vector<8x1024xi32>
    %24 = arith.xori %21, %23 : vector<8x1024xi32>
    %c2146121005_i32 = arith.constant 2146121005 : i32
    %25 = vector.broadcast %c2146121005_i32 : i32 to vector<8x1024xi32>
    %26 = arith.xori %24, %25 : vector<8x1024xi32>
    %c16_i32_1 = arith.constant 16 : i32
    %27 = vector.broadcast %c16_i32_1 : i32 to vector<8x1024xi32>
    %28 = arith.shrui %26, %27 : vector<8x1024xi32>
    %29 = arith.xori %26, %28 : vector<8x1024xi32>
    %c-2048144789_i32_2 = arith.constant -2048144789 : i32
    %30 = vector.broadcast %c-2048144789_i32_2 : i32 to vector<8x1024xi32>
    %31 = arith.muli %29, %30 : vector<8x1024xi32>
    %c13_i32_3 = arith.constant 13 : i32
    %32 = vector.broadcast %c13_i32_3 : i32 to vector<8x1024xi32>
    %33 = arith.shrui %31, %32 : vector<8x1024xi32>
    %34 = arith.xori %31, %33 : vector<8x1024xi32>
    %c-1028477387_i32_4 = arith.constant -1028477387 : i32
    %35 = vector.broadcast %c-1028477387_i32_4 : i32 to vector<8x1024xi32>
    %36 = arith.muli %34, %35 : vector<8x1024xi32>
    %c16_i32_5 = arith.constant 16 : i32
    %37 = vector.broadcast %c16_i32_5 : i32 to vector<8x1024xi32>
    %38 = arith.shrui %36, %37 : vector<8x1024xi32>
    %39 = arith.xori %36, %38 : vector<8x1024xi32>
    %c8_i32_6 = arith.constant 8 : i32
    %40 = vector.broadcast %c8_i32_6 : i32 to vector<8x1024xi32>
    %41 = arith.shrui %39, %40 : vector<8x1024xi32>
    %42 = arith.sitofp %41 : vector<8x1024xi32> to vector<8x1024xf32>
    %cst = arith.constant 5.000000e-01 : f32
    %43 = vector.broadcast %cst : f32 to vector<8x1024xf32>
    %44 = arith.addf %42, %43 : vector<8x1024xf32>
    %cst_7 = arith.constant 5.96046448E-8 : f32
    %45 = vector.broadcast %cst_7 : f32 to vector<8x1024xf32>
    %46 = arith.mulf %44, %45 : vector<8x1024xf32>
    %cst_8 = arith.constant 5.000000e-01 : f32
    %47 = vector.broadcast %cst_8 : f32 to vector<8x1024xf32>
    %48 = arith.subf %46, %47 : vector<8x1024xf32>
    %49 = arith.mulf %48, %48 : vector<8x1024xf32>
    %cst_9 = arith.constant -39.6968307 : f32
    %50 = vector.broadcast %cst_9 : f32 to vector<8x1024xf32>
    %51 = arith.mulf %50, %49 : vector<8x1024xf32>
    %cst_10 = arith.constant 220.946106 : f32
    %52 = vector.broadcast %cst_10 : f32 to vector<8x1024xf32>
    %53 = arith.addf %51, %52 : vector<8x1024xf32>
    %54 = arith.mulf %53, %49 : vector<8x1024xf32>
    %cst_11 = arith.constant -275.928497 : f32
    %55 = vector.broadcast %cst_11 : f32 to vector<8x1024xf32>
    %56 = arith.addf %54, %55 : vector<8x1024xf32>
    %57 = arith.mulf %56, %49 : vector<8x1024xf32>
    %cst_12 = arith.constant 138.357758 : f32
    %58 = vector.broadcast %cst_12 : f32 to vector<8x1024xf32>
    %59 = arith.addf %57, %58 : vector<8x1024xf32>
    %60 = arith.mulf %59, %49 : vector<8x1024xf32>
    %cst_13 = arith.constant -30.6647987 : f32
    %61 = vector.broadcast %cst_13 : f32 to vector<8x1024xf32>
    %62 = arith.addf %60, %61 : vector<8x1024xf32>
    %63 = arith.mulf %62, %49 : vector<8x1024xf32>
    %cst_14 = arith.constant 2.50662827 : f32
    %64 = vector.broadcast %cst_14 : f32 to vector<8x1024xf32>
    %65 = arith.addf %63, %64 : vector<8x1024xf32>
    %cst_15 = arith.constant -54.4760971 : f32
    %66 = vector.broadcast %cst_15 : f32 to vector<8x1024xf32>
    %67 = arith.mulf %66, %49 : vector<8x1024xf32>
    %cst_16 = arith.constant 161.585831 : f32
    %68 = vector.broadcast %cst_16 : f32 to vector<8x1024xf32>
    %69 = arith.addf %67, %68 : vector<8x1024xf32>
    %70 = arith.mulf %69, %49 : vector<8x1024xf32>
    %cst_17 = arith.constant -155.698975 : f32
    %71 = vector.broadcast %cst_17 : f32 to vector<8x1024xf32>
    %72 = arith.addf %70, %71 : vector<8x1024xf32>
    %73 = arith.mulf %72, %49 : vector<8x1024xf32>
    %cst_18 = arith.constant 66.8013153 : f32
    %74 = vector.broadcast %cst_18 : f32 to vector<8x1024xf32>
    %75 = arith.addf %73, %74 : vector<8x1024xf32>
    %76 = arith.mulf %75, %49 : vector<8x1024xf32>
    %cst_19 = arith.constant -13.2806816 : f32
    %77 = vector.broadcast %cst_19 : f32 to vector<8x1024xf32>
    %78 = arith.addf %76, %77 : vector<8x1024xf32>
    %79 = arith.mulf %78, %49 : vector<8x1024xf32>
    %cst_20 = arith.constant 1.000000e+00 : f32
    %80 = vector.broadcast %cst_20 : f32 to vector<8x1024xf32>
    %81 = arith.addf %79, %80 : vector<8x1024xf32>
    %82 = arith.mulf %65, %48 : vector<8x1024xf32>
    %83 = arith.divf %82, %81 : vector<8x1024xf32>
    %cst_21 = arith.constant 1.000000e+00 : f32
    %84 = vector.broadcast %cst_21 : f32 to vector<8x1024xf32>
    %85 = arith.subf %84, %46 : vector<8x1024xf32>
    %86 = arith.minimumf %46, %85 : vector<8x1024xf32>
    %87 = math.log %86 : vector<8x1024xf32>
    %cst_22 = arith.constant -2.000000e+00 : f32
    %88 = vector.broadcast %cst_22 : f32 to vector<8x1024xf32>
    %89 = arith.mulf %88, %87 : vector<8x1024xf32>
    %90 = math.sqrt %89 : vector<8x1024xf32>
    %cst_23 = arith.constant -0.0077848942 : f32
    %91 = vector.broadcast %cst_23 : f32 to vector<8x1024xf32>
    %92 = arith.mulf %91, %90 : vector<8x1024xf32>
    %cst_24 = arith.constant -0.322396457 : f32
    %93 = vector.broadcast %cst_24 : f32 to vector<8x1024xf32>
    %94 = arith.addf %92, %93 : vector<8x1024xf32>
    %95 = arith.mulf %94, %90 : vector<8x1024xf32>
    %cst_25 = arith.constant -2.40075827 : f32
    %96 = vector.broadcast %cst_25 : f32 to vector<8x1024xf32>
    %97 = arith.addf %95, %96 : vector<8x1024xf32>
    %98 = arith.mulf %97, %90 : vector<8x1024xf32>
    %cst_26 = arith.constant -2.54973245 : f32
    %99 = vector.broadcast %cst_26 : f32 to vector<8x1024xf32>
    %100 = arith.addf %98, %99 : vector<8x1024xf32>
    %101 = arith.mulf %100, %90 : vector<8x1024xf32>
    %cst_27 = arith.constant 4.37466431 : f32
    %102 = vector.broadcast %cst_27 : f32 to vector<8x1024xf32>
    %103 = arith.addf %101, %102 : vector<8x1024xf32>
    %104 = arith.mulf %103, %90 : vector<8x1024xf32>
    %cst_28 = arith.constant 2.938164 : f32
    %105 = vector.broadcast %cst_28 : f32 to vector<8x1024xf32>
    %106 = arith.addf %104, %105 : vector<8x1024xf32>
    %cst_29 = arith.constant 0.00778469583 : f32
    %107 = vector.broadcast %cst_29 : f32 to vector<8x1024xf32>
    %108 = arith.mulf %107, %90 : vector<8x1024xf32>
    %cst_30 = arith.constant 0.322467119 : f32
    %109 = vector.broadcast %cst_30 : f32 to vector<8x1024xf32>
    %110 = arith.addf %108, %109 : vector<8x1024xf32>
    %111 = arith.mulf %110, %90 : vector<8x1024xf32>
    %cst_31 = arith.constant 2.44513416 : f32
    %112 = vector.broadcast %cst_31 : f32 to vector<8x1024xf32>
    %113 = arith.addf %111, %112 : vector<8x1024xf32>
    %114 = arith.mulf %113, %90 : vector<8x1024xf32>
    %cst_32 = arith.constant 3.7544086 : f32
    %115 = vector.broadcast %cst_32 : f32 to vector<8x1024xf32>
    %116 = arith.addf %114, %115 : vector<8x1024xf32>
    %117 = arith.mulf %116, %90 : vector<8x1024xf32>
    %cst_33 = arith.constant 1.000000e+00 : f32
    %118 = vector.broadcast %cst_33 : f32 to vector<8x1024xf32>
    %119 = arith.addf %117, %118 : vector<8x1024xf32>
    %120 = arith.divf %106, %119 : vector<8x1024xf32>
    %cst_34 = arith.constant 5.000000e-01 : f32
    %121 = vector.broadcast %cst_34 : f32 to vector<8x1024xf32>
    %122 = arith.cmpf olt, %46, %121 : vector<8x1024xf32>
    %cst_35 = arith.constant 0.000000e+00 : f32
    %123 = vector.broadcast %cst_35 : f32 to vector<8x1024xf32>
    %124 = arith.subf %123, %120 : vector<8x1024xf32>
    %125 = arith.select %122, %120, %124 : vector<8x1024xi1>, vector<8x1024xf32>
    %cst_36 = arith.constant 2.425000e-02 : f32
    %126 = vector.broadcast %cst_36 : f32 to vector<8x1024xf32>
    %127 = arith.cmpf olt, %86, %126 : vector<8x1024xf32>
    %128 = arith.select %127, %125, %83 : vector<8x1024xi1>, vector<8x1024xf32>
    %c0_37 = arith.constant 0 : index
    %c0_38 = arith.constant 0 : index
    %129 = vector.load %arg2[%c0_37, %c0_38] : memref<8x1024xf32, #tpu.memory_space<vmem>>, vector<8x1024xf32>
    %cst_39 = arith.constant 1.000000e+00 : f32
    %130 = vector.broadcast %cst_39 : f32 to vector<8x1024xf32>
    %131 = arith.mulf %130, %128 : vector<8x1024xf32>
    %cst_40 = arith.constant 1.000000e+00 : f32
    %132 = vector.broadcast %cst_40 : f32 to vector<8x1024xf32>
    %133 = arith.addf %132, %131 : vector<8x1024xf32>
    %134 = arith.mulf %129, %133 : vector<8x1024xf32>
    %c0_41 = arith.constant 0 : index
    %c0_42 = arith.constant 0 : index
    %135 = vector.load %arg3[%c0_41, %c0_42] : memref<8x1024xf32, #tpu.memory_space<vmem>>, vector<8x1024xf32>
    tpu.vector_store %arg3[%c0_41, %c0_42], %134 {strides = array<i32>} : memref<8x1024xf32, #tpu.memory_space<vmem>>, vector<8x1024xf32>,
    return
  }
  func.func @transform_0(%arg0: i32, %arg1: memref<1xi32, #tpu.memory_space<smem>>) -> (i32, i32) {
    %c0_i32 = arith.constant 0 : i32
    %c0_i32_0 = arith.constant 0 : i32
    return %arg0, %c0_i32 : i32, i32
  }
  func.func @transform_1(%arg0: i32, %arg1: memref<1xi32, #tpu.memory_space<smem>>) -> (i32, i32) {
    %c0_i32 = arith.constant 0 : i32
    %c0_i32_0 = arith.constant 0 : i32
    return %arg0, %c0_i32 : i32, i32
  }
}

</mosaic_0001>

<llo_original>
// kernel: tpu_custom_call.1
$region0: #{tpu_custom_call.1}
  #allocation0 [shape = 'u32[]', space=smem, size = 0x4, offset = 0x4, fixed_abs, tag = 'smem constant byte address 0x4 - core index']
  #allocation1 [shape = 'u32[144,128]{1,0:T(1,128)}', space=vmem, size = 0x12000, scoped, tag = 'internal scratch']
  #allocation2 [shape = 's32[1]{0}', space=sflag, size = 0x4, scoped, tag = 'scoped memory for tpu_custom_call.1']
  #allocation3 [shape = 's32[1]{0:T(128)S(6)}', space=smem, size = 0x200, scoped, tag = 'prefetched SMEM operand 0']
  %s0 = inlined_call_operand.<no memory space> [shape: s32[1], index: 0, kind: input, shape index: {}]
  %s1 = inlined_call_operand.hbm [shape: f32[8,1024], index: 1, kind: input, shape index: {}]
  %s2 = inlined_call_operand.hbm [shape: f32[8,1024], index: 2, kind: output, shape index: {}]
  %s3 = sld [smem:[#allocation0]]
  $region18: #{tpu_custom_call.1} parent=0
    _
  %s5 = ssub.s32 1, %s3
  %s6 = scalar_select 0, %s5, %s3
  %7 = sst [smem:[#allocation3]] %s0
  $region1: #{tpu_custom_call.1} parent=0
    #allocation4 [shape = 'u8[32768]{0}', space=vmem, size = 0x8000, scoped, tag = 'input window, operand 1, single buffered']
    #allocation5 [shape = 's32[1]{0}', space=sflag, size = 0x4, scoped, tag = 'scoped memory for tpu_custom_call.1']
    #allocation6 [shape = 's32[1]{0}', space=sflag, size = 0x4, scoped, tag = 'scoped memory for tpu_custom_call.1']
    #allocation7 [shape = 'u8[32768]{0}', space=vmem, size = 0x8000, scoped, tag = 'output window, operand 0, single buffered']
    %8 = vsyncpa [#allocation5], 0
    %9 = vsyncpa [#allocation6], 0
    // Predicated region
    $region2: #{tpu_custom_call.1} parent=1 // pred_check
      _
    $region3: #{tpu_custom_call.1} parent=1 // pred_check_branch
      %11 = sbr.rel (0) target = $region5
    $region4: #{tpu_custom_call.1} parent=1 // pred_region
      %s13 = ssub.s32 1024, 1024
      %14 = vsyncadd [#allocation5], %s13
      %s16 = sshll.u32 [#allocation4], 4
      %s17 = int_to_ptr.vmem [resolvable:$true] %s16
      %19 = dma.hbm_to_vmem [thread:$0]  %s1, 1024, %s17, [#allocation5]
    $region5: #{tpu_custom_call.1} parent=1 // pred_fallthru
      _
    // Predicated region
    $region6: #{tpu_custom_call.1} parent=1 // pred_check
      _
    $region7: #{tpu_custom_call.1} parent=1 // pred_check_branch
      %21 = sbr.rel (0) target = $region9
    $region8: #{tpu_custom_call.1} parent=1 // pred_region
      %22 = dma.done [#allocation5], 1024
    $region9: #{tpu_custom_call.1} parent=1 // pred_fallthru
      _
    %v23 = vlaneseq
    %v24 = vshrl.u32 %v23, 7
    %v25 = vlaneseq
    %v26 = vand.u32 %v25, 127
    %v27 = vadd.s32 %v26, 128
    %v28 = vadd.s32 %v26, 256
    %v29 = vadd.s32 %v26, 384
    %v30 = vadd.s32 %v26, 512
    %v31 = vadd.s32 %v26, 640
    %v32 = vadd.s32 %v26, 768
    %v33 = vadd.s32 %v26, 896
    %s34 = smul.u32 0, 8
    %v35 = vstv %s34
    %v36 = vadd.s32 %v35, %v24
    %v37 = vmul.u32 %v36, 1024
    %v38 = vadd.s32 %v37, %v26
    %v39 = vadd.s32 %v37, %v27
    %v40 = vadd.s32 %v37, %v28
    %v41 = vadd.s32 %v37, %v29
    %v42 = vadd.s32 %v37, %v30
    %v43 = vadd.s32 %v37, %v31
    %v44 = vadd.s32 %v37, %v32
    %v45 = vadd.s32 %v37, %v33
    %s46 = sld [smem:[#allocation3]]
    %s47 = smul.u32 %s46, 2654435761
    %v48 = vstv %s47
    %v49 = vxor.u32 %v38, %v48
    %v50 = vxor.u32 %v39, %v48
    %v51 = vxor.u32 %v40, %v48
    %v52 = vxor.u32 %v41, %v48
    %v53 = vxor.u32 %v42, %v48
    %v54 = vxor.u32 %v43, %v48
    %v55 = vxor.u32 %v44, %v48
    %v56 = vxor.u32 %v45, %v48
    %v57 = vshrl.u32 %v49, 16
    %v58 = vshrl.u32 %v50, 16
    %v59 = vshrl.u32 %v51, 16
    %v60 = vshrl.u32 %v52, 16
    %v61 = vshrl.u32 %v53, 16
    %v62 = vshrl.u32 %v54, 16
    %v63 = vshrl.u32 %v55, 16
    %v64 = vshrl.u32 %v56, 16
    %v65 = vxor.u32 %v49, %v57
    %v66 = vxor.u32 %v50, %v58
    %v67 = vxor.u32 %v51, %v59
    %v68 = vxor.u32 %v52, %v60
    %v69 = vxor.u32 %v53, %v61
    %v70 = vxor.u32 %v54, %v62
    %v71 = vxor.u32 %v55, %v63
    %v72 = vxor.u32 %v56, %v64
    %v73 = vmul.u32 %v65, 2246822507
    %v74 = vmul.u32 %v66, 2246822507
    %v75 = vmul.u32 %v67, 2246822507
    %v76 = vmul.u32 %v68, 2246822507
    %v77 = vmul.u32 %v69, 2246822507
    %v78 = vmul.u32 %v70, 2246822507
    %v79 = vmul.u32 %v71, 2246822507
    %v80 = vmul.u32 %v72, 2246822507
    %v81 = vshrl.u32 %v73, 13
    %v82 = vshrl.u32 %v74, 13
    %v83 = vshrl.u32 %v75, 13
    %v84 = vshrl.u32 %v76, 13
    %v85 = vshrl.u32 %v77, 13
    %v86 = vshrl.u32 %v78, 13
    %v87 = vshrl.u32 %v79, 13
    %v88 = vshrl.u32 %v80, 13
    %v89 = vxor.u32 %v73, %v81
    %v90 = vxor.u32 %v74, %v82
    %v91 = vxor.u32 %v75, %v83
    %v92 = vxor.u32 %v76, %v84
    %v93 = vxor.u32 %v77, %v85
    %v94 = vxor.u32 %v78, %v86
    %v95 = vxor.u32 %v79, %v87
    %v96 = vxor.u32 %v80, %v88
    %v97 = vmul.u32 %v89, 3266489909
    %v98 = vmul.u32 %v90, 3266489909
    %v99 = vmul.u32 %v91, 3266489909
    %v100 = vmul.u32 %v92, 3266489909
    %v101 = vmul.u32 %v93, 3266489909
    %v102 = vmul.u32 %v94, 3266489909
    %v103 = vmul.u32 %v95, 3266489909
    %v104 = vmul.u32 %v96, 3266489909
    %v105 = vshrl.u32 %v97, 16
    %v106 = vshrl.u32 %v98, 16
    %v107 = vshrl.u32 %v99, 16
    %v108 = vshrl.u32 %v100, 16
    %v109 = vshrl.u32 %v101, 16
    %v110 = vshrl.u32 %v102, 16
    %v111 = vshrl.u32 %v103, 16
    %v112 = vshrl.u32 %v104, 16
    %v113 = vxor.u32 %v97, %v105
    %v114 = vxor.u32 %v98, %v106
    %v115 = vxor.u32 %v99, %v107
    %v116 = vxor.u32 %v100, %v108
    %v117 = vxor.u32 %v101, %v109
    %v118 = vxor.u32 %v102, %v110
    %v119 = vxor.u32 %v103, %v111
    %v120 = vxor.u32 %v104, %v112
    %v121 = vxor.u32 %v113, 2146121005
    %v122 = vxor.u32 %v114, 2146121005
    %v123 = vxor.u32 %v115, 2146121005
    %v124 = vxor.u32 %v116, 2146121005
    %v125 = vxor.u32 %v117, 2146121005
    %v126 = vxor.u32 %v118, 2146121005
    %v127 = vxor.u32 %v119, 2146121005
    %v128 = vxor.u32 %v120, 2146121005
    %v129 = vshrl.u32 %v121, 16
    %v130 = vshrl.u32 %v122, 16
    %v131 = vshrl.u32 %v123, 16
    %v132 = vshrl.u32 %v124, 16
    %v133 = vshrl.u32 %v125, 16
    %v134 = vshrl.u32 %v126, 16
    %v135 = vshrl.u32 %v127, 16
    %v136 = vshrl.u32 %v128, 16
    %v137 = vxor.u32 %v121, %v129
    %v138 = vxor.u32 %v122, %v130
    %v139 = vxor.u32 %v123, %v131
    %v140 = vxor.u32 %v124, %v132
    %v141 = vxor.u32 %v125, %v133
    %v142 = vxor.u32 %v126, %v134
    %v143 = vxor.u32 %v127, %v135
    %v144 = vxor.u32 %v128, %v136
    %v145 = vmul.u32 %v137, 2246822507
    %v146 = vmul.u32 %v138, 2246822507
    %v147 = vmul.u32 %v139, 2246822507
    %v148 = vmul.u32 %v140, 2246822507
    %v149 = vmul.u32 %v141, 2246822507
    %v150 = vmul.u32 %v142, 2246822507
    %v151 = vmul.u32 %v143, 2246822507
    %v152 = vmul.u32 %v144, 2246822507
    %v153 = vshrl.u32 %v145, 13
    %v154 = vshrl.u32 %v146, 13
    %v155 = vshrl.u32 %v147, 13
    %v156 = vshrl.u32 %v148, 13
    %v157 = vshrl.u32 %v149, 13
    %v158 = vshrl.u32 %v150, 13
    %v159 = vshrl.u32 %v151, 13
    %v160 = vshrl.u32 %v152, 13
    %v161 = vxor.u32 %v145, %v153
    %v162 = vxor.u32 %v146, %v154
    %v163 = vxor.u32 %v147, %v155
    %v164 = vxor.u32 %v148, %v156
    %v165 = vxor.u32 %v149, %v157
    %v166 = vxor.u32 %v150, %v158
    %v167 = vxor.u32 %v151, %v159
    %v168 = vxor.u32 %v152, %v160
    %v169 = vmul.u32 %v161, 3266489909
    %v170 = vmul.u32 %v162, 3266489909
    %v171 = vmul.u32 %v163, 3266489909
    %v172 = vmul.u32 %v164, 3266489909
    %v173 = vmul.u32 %v165, 3266489909
    %v174 = vmul.u32 %v166, 3266489909
    %v175 = vmul.u32 %v167, 3266489909
    %v176 = vmul.u32 %v168, 3266489909
    %v177 = vshrl.u32 %v169, 16
    %v178 = vshrl.u32 %v170, 16
    %v179 = vshrl.u32 %v171, 16
    %v180 = vshrl.u32 %v172, 16
    %v181 = vshrl.u32 %v173, 16
    %v182 = vshrl.u32 %v174, 16
    %v183 = vshrl.u32 %v175, 16
    %v184 = vshrl.u32 %v176, 16
    %v185 = vxor.u32 %v169, %v177
    %v186 = vxor.u32 %v170, %v178
    %v187 = vxor.u32 %v171, %v179
    %v188 = vxor.u32 %v172, %v180
    %v189 = vxor.u32 %v173, %v181
    %v190 = vxor.u32 %v174, %v182
    %v191 = vxor.u32 %v175, %v183
    %v192 = vxor.u32 %v176, %v184
    %v193 = vshrl.u32 %v185, 8
    %v194 = vshrl.u32 %v186, 8
    %v195 = vshrl.u32 %v187, 8
    %v196 = vshrl.u32 %v188, 8
    %v197 = vshrl.u32 %v189, 8
    %v198 = vshrl.u32 %v190, 8
    %v199 = vshrl.u32 %v191, 8
    %v200 = vshrl.u32 %v192, 8
    %v201 = vcvt.s32.f32 %v193
    %v202 = vcvt.s32.f32 %v194
    %v203 = vcvt.s32.f32 %v195
    %v204 = vcvt.s32.f32 %v196
    %v205 = vcvt.s32.f32 %v197
    %v206 = vcvt.s32.f32 %v198
    %v207 = vcvt.s32.f32 %v199
    %v208 = vcvt.s32.f32 %v200
    %v209 = vadd.f32 %v201, 0.5
    %v210 = vadd.f32 %v202, 0.5
    %v211 = vadd.f32 %v203, 0.5
    %v212 = vadd.f32 %v204, 0.5
    %v213 = vadd.f32 %v205, 0.5
    %v214 = vadd.f32 %v206, 0.5
    %v215 = vadd.f32 %v207, 0.5
    %v216 = vadd.f32 %v208, 0.5
    %v217 = vmul.f32 %v209, 5.9604645e-08
    %v218 = vmul.f32 %v210, 5.9604645e-08
    %v219 = vmul.f32 %v211, 5.9604645e-08
    %v220 = vmul.f32 %v212, 5.9604645e-08
    %v221 = vmul.f32 %v213, 5.9604645e-08
    %v222 = vmul.f32 %v214, 5.9604645e-08
    %v223 = vmul.f32 %v215, 5.9604645e-08
    %v224 = vmul.f32 %v216, 5.9604645e-08
    %v225 = vsub.f32 %v217, 0.5
    %v226 = vsub.f32 %v218, 0.5
    %v227 = vsub.f32 %v219, 0.5
    %v228 = vsub.f32 %v220, 0.5
    %v229 = vsub.f32 %v221, 0.5
    %v230 = vsub.f32 %v222, 0.5
    %v231 = vsub.f32 %v223, 0.5
    %v232 = vsub.f32 %v224, 0.5
    %v233 = vmul.f32 %v225, %v225
    %v234 = vmul.f32 %v226, %v226
    %v235 = vmul.f32 %v227, %v227
    %v236 = vmul.f32 %v228, %v228
    %v237 = vmul.f32 %v229, %v229
    %v238 = vmul.f32 %v230, %v230
    %v239 = vmul.f32 %v231, %v231
    %v240 = vmul.f32 %v232, %v232
    %v241 = vmul.f32 %v233, -39.69683
    %v242 = vmul.f32 %v234, -39.69683
    %v243 = vmul.f32 %v235, -39.69683
    %v244 = vmul.f32 %v236, -39.69683
    %v245 = vmul.f32 %v237, -39.69683
    %v246 = vmul.f32 %v238, -39.69683
    %v247 = vmul.f32 %v239, -39.69683
    %v248 = vmul.f32 %v240, -39.69683
    %v249 = vadd.f32 %v241, 220.9461
    %v250 = vadd.f32 %v242, 220.9461
    %v251 = vadd.f32 %v243, 220.9461
    %v252 = vadd.f32 %v244, 220.9461
    %v253 = vadd.f32 %v245, 220.9461
    %v254 = vadd.f32 %v246, 220.9461
    %v255 = vadd.f32 %v247, 220.9461
    %v256 = vadd.f32 %v248, 220.9461
    %v257 = vmul.f32 %v249, %v233
    %v258 = vmul.f32 %v250, %v234
    %v259 = vmul.f32 %v251, %v235
    %v260 = vmul.f32 %v252, %v236
    %v261 = vmul.f32 %v253, %v237
    %v262 = vmul.f32 %v254, %v238
    %v263 = vmul.f32 %v255, %v239
    %v264 = vmul.f32 %v256, %v240
    %v265 = vadd.f32 %v257, -275.9285
    %v266 = vadd.f32 %v258, -275.9285
    %v267 = vadd.f32 %v259, -275.9285
    %v268 = vadd.f32 %v260, -275.9285
    %v269 = vadd.f32 %v261, -275.9285
    %v270 = vadd.f32 %v262, -275.9285
    %v271 = vadd.f32 %v263, -275.9285
    %v272 = vadd.f32 %v264, -275.9285
    %v273 = vmul.f32 %v265, %v233
    %v274 = vmul.f32 %v266, %v234
    %v275 = vmul.f32 %v267, %v235
    %v276 = vmul.f32 %v268, %v236
    %v277 = vmul.f32 %v269, %v237
    %v278 = vmul.f32 %v270, %v238
    %v279 = vmul.f32 %v271, %v239
    %v280 = vmul.f32 %v272, %v240
    %v281 = vadd.f32 %v273, 138.35776
    %v282 = vadd.f32 %v274, 138.35776
    %v283 = vadd.f32 %v275, 138.35776
    %v284 = vadd.f32 %v276, 138.35776
    %v285 = vadd.f32 %v277, 138.35776
    %v286 = vadd.f32 %v278, 138.35776
    %v287 = vadd.f32 %v279, 138.35776
    %v288 = vadd.f32 %v280, 138.35776
    %v289 = vmul.f32 %v281, %v233
    %v290 = vmul.f32 %v282, %v234
    %v291 = vmul.f32 %v283, %v235
    %v292 = vmul.f32 %v284, %v236
    %v293 = vmul.f32 %v285, %v237
    %v294 = vmul.f32 %v286, %v238
    %v295 = vmul.f32 %v287, %v239
    %v296 = vmul.f32 %v288, %v240
    %v297 = vadd.f32 %v289, -30.664799
    %v298 = vadd.f32 %v290, -30.664799
    %v299 = vadd.f32 %v291, -30.664799
    %v300 = vadd.f32 %v292, -30.664799
    %v301 = vadd.f32 %v293, -30.664799
    %v302 = vadd.f32 %v294, -30.664799
    %v303 = vadd.f32 %v295, -30.664799
    %v304 = vadd.f32 %v296, -30.664799
    %v305 = vmul.f32 %v297, %v233
    %v306 = vmul.f32 %v298, %v234
    %v307 = vmul.f32 %v299, %v235
    %v308 = vmul.f32 %v300, %v236
    %v309 = vmul.f32 %v301, %v237
    %v310 = vmul.f32 %v302, %v238
    %v311 = vmul.f32 %v303, %v239
    %v312 = vmul.f32 %v304, %v240
    %v313 = vadd.f32 %v305, 2.5066283
    %v314 = vadd.f32 %v306, 2.5066283
    %v315 = vadd.f32 %v307, 2.5066283
    %v316 = vadd.f32 %v308, 2.5066283
    %v317 = vadd.f32 %v309, 2.5066283
    %v318 = vadd.f32 %v310, 2.5066283
    %v319 = vadd.f32 %v311, 2.5066283
    %v320 = vadd.f32 %v312, 2.5066283
    %v321 = vmul.f32 %v233, -54.476097
    %v322 = vmul.f32 %v234, -54.476097
    %v323 = vmul.f32 %v235, -54.476097
    %v324 = vmul.f32 %v236, -54.476097
    %v325 = vmul.f32 %v237, -54.476097
    %v326 = vmul.f32 %v238, -54.476097
    %v327 = vmul.f32 %v239, -54.476097
    %v328 = vmul.f32 %v240, -54.476097
    %v329 = vadd.f32 %v321, 161.58583
    %v330 = vadd.f32 %v322, 161.58583
    %v331 = vadd.f32 %v323, 161.58583
    %v332 = vadd.f32 %v324, 161.58583
    %v333 = vadd.f32 %v325, 161.58583
    %v334 = vadd.f32 %v326, 161.58583
    %v335 = vadd.f32 %v327, 161.58583
    %v336 = vadd.f32 %v328, 161.58583
    %v337 = vmul.f32 %v329, %v233
    %v338 = vmul.f32 %v330, %v234
    %v339 = vmul.f32 %v331, %v235
    %v340 = vmul.f32 %v332, %v236
    %v341 = vmul.f32 %v333, %v237
    %v342 = vmul.f32 %v334, %v238
    %v343 = vmul.f32 %v335, %v239
    %v344 = vmul.f32 %v336, %v240
    %v345 = vadd.f32 %v337, -155.69897
    %v346 = vadd.f32 %v338, -155.69897
    %v347 = vadd.f32 %v339, -155.69897
    %v348 = vadd.f32 %v340, -155.69897
    %v349 = vadd.f32 %v341, -155.69897
    %v350 = vadd.f32 %v342, -155.69897
    %v351 = vadd.f32 %v343, -155.69897
    %v352 = vadd.f32 %v344, -155.69897
    %v353 = vmul.f32 %v345, %v233
    %v354 = vmul.f32 %v346, %v234
    %v355 = vmul.f32 %v347, %v235
    %v356 = vmul.f32 %v348, %v236
    %v357 = vmul.f32 %v349, %v237
    %v358 = vmul.f32 %v350, %v238
    %v359 = vmul.f32 %v351, %v239
    %v360 = vmul.f32 %v352, %v240
    %v361 = vadd.f32 %v353, 66.801315
    %v362 = vadd.f32 %v354, 66.801315
    %v363 = vadd.f32 %v355, 66.801315
    %v364 = vadd.f32 %v356, 66.801315
    %v365 = vadd.f32 %v357, 66.801315
    %v366 = vadd.f32 %v358, 66.801315
    %v367 = vadd.f32 %v359, 66.801315
    %v368 = vadd.f32 %v360, 66.801315
    %v369 = vmul.f32 %v361, %v233
    %v370 = vmul.f32 %v362, %v234
    %v371 = vmul.f32 %v363, %v235
    %v372 = vmul.f32 %v364, %v236
    %v373 = vmul.f32 %v365, %v237
    %v374 = vmul.f32 %v366, %v238
    %v375 = vmul.f32 %v367, %v239
    %v376 = vmul.f32 %v368, %v240
    %v377 = vadd.f32 %v369, -13.280682
    %v378 = vadd.f32 %v370, -13.280682
    %v379 = vadd.f32 %v371, -13.280682
    %v380 = vadd.f32 %v372, -13.280682
    %v381 = vadd.f32 %v373, -13.280682
    %v382 = vadd.f32 %v374, -13.280682
    %v383 = vadd.f32 %v375, -13.280682
    %v384 = vadd.f32 %v376, -13.280682
    %v385 = vmul.f32 %v377, %v233
    %v386 = vmul.f32 %v378, %v234
    %v387 = vmul.f32 %v379, %v235
    %v388 = vmul.f32 %v380, %v236
    %v389 = vmul.f32 %v381, %v237
    %v390 = vmul.f32 %v382, %v238
    %v391 = vmul.f32 %v383, %v239
    %v392 = vmul.f32 %v384, %v240
    %v393 = vadd.f32 %v385, 1.0
    %v394 = vadd.f32 %v386, 1.0
    %v395 = vadd.f32 %v387, 1.0
    %v396 = vadd.f32 %v388, 1.0
    %v397 = vadd.f32 %v389, 1.0
    %v398 = vadd.f32 %v390, 1.0
    %v399 = vadd.f32 %v391, 1.0
    %v400 = vadd.f32 %v392, 1.0
    %v401 = vmul.f32 %v313, %v225
    %v402 = vmul.f32 %v314, %v226
    %v403 = vmul.f32 %v315, %v227
    %v404 = vmul.f32 %v316, %v228
    %v405 = vmul.f32 %v317, %v229
    %v406 = vmul.f32 %v318, %v230
    %v407 = vmul.f32 %v319, %v231
    %v408 = vmul.f32 %v320, %v232
    %v409 = vrcp.pop %v393
    %v410 = vmul.f32 %v401, %v409
    %v411 = vrcp.pop %v394
    %v412 = vmul.f32 %v402, %v411
    %v413 = vrcp.pop %v395
    %v414 = vmul.f32 %v403, %v413
    %v415 = vrcp.pop %v396
    %v416 = vmul.f32 %v404, %v415
    %v417 = vrcp.pop %v397
    %v418 = vmul.f32 %v405, %v417
    %v419 = vrcp.pop %v398
    %v420 = vmul.f32 %v406, %v419
    %v421 = vrcp.pop %v399
    %v422 = vmul.f32 %v407, %v421
    %v423 = vrcp.pop %v400
    %v424 = vmul.f32 %v408, %v423
    %v425 = vsub.f32 1.0, %v217
    %v426 = vsub.f32 1.0, %v218
    %v427 = vsub.f32 1.0, %v219
    %v428 = vsub.f32 1.0, %v220
    %v429 = vsub.f32 1.0, %v221
    %v430 = vsub.f32 1.0, %v222
    %v431 = vsub.f32 1.0, %v223
    %v432 = vsub.f32 1.0, %v224
    %v433 = vmin.f32 %v217, %v425
    %v434 = vmin.f32 %v218, %v426
    %v435 = vmin.f32 %v219, %v427
    %v436 = vmin.f32 %v220, %v428
    %v437 = vmin.f32 %v221, %v429
    %v438 = vmin.f32 %v222, %v430
    %v439 = vmin.f32 %v223, %v431
    %v440 = vmin.f32 %v224, %v432
    %v441 = vlog2.pop %v433
    %v442 = vmul.f32 %v441, 0.6931472
    %v443 = vlog2.pop %v434
    %v444 = vmul.f32 %v443, 0.6931472
    %v445 = vlog2.pop %v435
    %v446 = vmul.f32 %v445, 0.6931472
    %v447 = vlog2.pop %v436
    %v448 = vmul.f32 %v447, 0.6931472
    %v449 = vlog2.pop %v437
    %v450 = vmul.f32 %v449, 0.6931472
    %v451 = vlog2.pop %v438
    %v452 = vmul.f32 %v451, 0.6931472
    %v453 = vlog2.pop %v439
    %v454 = vmul.f32 %v453, 0.6931472
    %v455 = vlog2.pop %v440
    %v456 = vmul.f32 %v455, 0.6931472
    %v457 = vmul.f32 %v442, -2.0
    %v458 = vmul.f32 %v444, -2.0
    %v459 = vmul.f32 %v446, -2.0
    %v460 = vmul.f32 %v448, -2.0
    %v461 = vmul.f32 %v450, -2.0
    %v462 = vmul.f32 %v452, -2.0
    %v463 = vmul.f32 %v454, -2.0
    %v464 = vmul.f32 %v456, -2.0
    %v465 = vrsqrt.pop %v457
    %v466 = vmul.f32 %v457, %v465
    %vm467 = vcmp.eq.f32.partialorder %v457, inf
    %v468 = vsel %vm467, %v457, %v466
    %vm469 = vcmp.eq.f32.partialorder %v457, 0.0
    %v470 = vand.u32 %v457, 2147483648
    %v471 = vsel %vm469, %v470, %v468
    %v472 = vrsqrt.pop %v458
    %v473 = vmul.f32 %v458, %v472
    %vm474 = vcmp.eq.f32.partialorder %v458, inf
    %v475 = vsel %vm474, %v458, %v473
    %vm476 = vcmp.eq.f32.partialorder %v458, 0.0
    %v477 = vand.u32 %v458, 2147483648
    %v478 = vsel %vm476, %v477, %v475
    %v479 = vrsqrt.pop %v459
    %v480 = vmul.f32 %v459, %v479
    %vm481 = vcmp.eq.f32.partialorder %v459, inf
    %v482 = vsel %vm481, %v459, %v480
    %vm483 = vcmp.eq.f32.partialorder %v459, 0.0
    %v484 = vand.u32 %v459, 2147483648
    %v485 = vsel %vm483, %v484, %v482
    %v486 = vrsqrt.pop %v460
    %v487 = vmul.f32 %v460, %v486
    %vm488 = vcmp.eq.f32.partialorder %v460, inf
    %v489 = vsel %vm488, %v460, %v487
    %vm490 = vcmp.eq.f32.partialorder %v460, 0.0
    %v491 = vand.u32 %v460, 2147483648
    %v492 = vsel %vm490, %v491, %v489
    %v493 = vrsqrt.pop %v461
    %v494 = vmul.f32 %v461, %v493
    %vm495 = vcmp.eq.f32.partialorder %v461, inf
    %v496 = vsel %vm495, %v461, %v494
    %vm497 = vcmp.eq.f32.partialorder %v461, 0.0
    %v498 = vand.u32 %v461, 2147483648
    %v499 = vsel %vm497, %v498, %v496
    %v500 = vrsqrt.pop %v462
    %v501 = vmul.f32 %v462, %v500
    %vm502 = vcmp.eq.f32.partialorder %v462, inf
    %v503 = vsel %vm502, %v462, %v501
    %vm504 = vcmp.eq.f32.partialorder %v462, 0.0
    %v505 = vand.u32 %v462, 2147483648
    %v506 = vsel %vm504, %v505, %v503
    %v507 = vrsqrt.pop %v463
    %v508 = vmul.f32 %v463, %v507
    %vm509 = vcmp.eq.f32.partialorder %v463, inf
    %v510 = vsel %vm509, %v463, %v508
    %vm511 = vcmp.eq.f32.partialorder %v463, 0.0
    %v512 = vand.u32 %v463, 2147483648
    %v513 = vsel %vm511, %v512, %v510
    %v514 = vrsqrt.pop %v464
    %v515 = vmul.f32 %v464, %v514
    %vm516 = vcmp.eq.f32.partialorder %v464, inf
    %v517 = vsel %vm516, %v464, %v515
    %vm518 = vcmp.eq.f32.partialorder %v464, 0.0
    %v519 = vand.u32 %v464, 2147483648
    %v520 = vsel %vm518, %v519, %v517
    %v521 = vmul.f32 %v471, -0.007784894
    %v522 = vmul.f32 %v478, -0.007784894
    %v523 = vmul.f32 %v485, -0.007784894
    %v524 = vmul.f32 %v492, -0.007784894
    %v525 = vmul.f32 %v499, -0.007784894
    %v526 = vmul.f32 %v506, -0.007784894
    %v527 = vmul.f32 %v513, -0.007784894
    %v528 = vmul.f32 %v520, -0.007784894
    %v529 = vadd.f32 %v521, -0.32239646
    %v530 = vadd.f32 %v522, -0.32239646
    %v531 = vadd.f32 %v523, -0.32239646
    %v532 = vadd.f32 %v524, -0.32239646
    %v533 = vadd.f32 %v525, -0.32239646
    %v534 = vadd.f32 %v526, -0.32239646
    %v535 = vadd.f32 %v527, -0.32239646
    %v536 = vadd.f32 %v528, -0.32239646
    %v537 = vmul.f32 %v529, %v471
    %v538 = vmul.f32 %v530, %v478
    %v539 = vmul.f32 %v531, %v485
    %v540 = vmul.f32 %v532, %v492
    %v541 = vmul.f32 %v533, %v499
    %v542 = vmul.f32 %v534, %v506
    %v543 = vmul.f32 %v535, %v513
    %v544 = vmul.f32 %v536, %v520
    %v545 = vadd.f32 %v537, -2.4007583
    %v546 = vadd.f32 %v538, -2.4007583
    %v547 = vadd.f32 %v539, -2.4007583
    %v548 = vadd.f32 %v540, -2.4007583
    %v549 = vadd.f32 %v541, -2.4007583
    %v550 = vadd.f32 %v542, -2.4007583
    %v551 = vadd.f32 %v543, -2.4007583
    %v552 = vadd.f32 %v544, -2.4007583
    %v553 = vmul.f32 %v545, %v471
    %v554 = vmul.f32 %v546, %v478
    %v555 = vmul.f32 %v547, %v485
    %v556 = vmul.f32 %v548, %v492
    %v557 = vmul.f32 %v549, %v499
    %v558 = vmul.f32 %v550, %v506
    %v559 = vmul.f32 %v551, %v513
    %v560 = vmul.f32 %v552, %v520
    %v561 = vadd.f32 %v553, -2.5497324
    %v562 = vadd.f32 %v554, -2.5497324
    %v563 = vadd.f32 %v555, -2.5497324
    %v564 = vadd.f32 %v556, -2.5497324
    %v565 = vadd.f32 %v557, -2.5497324
    %v566 = vadd.f32 %v558, -2.5497324
    %v567 = vadd.f32 %v559, -2.5497324
    %v568 = vadd.f32 %v560, -2.5497324
    %v569 = vmul.f32 %v561, %v471
    %v570 = vmul.f32 %v562, %v478
    %v571 = vmul.f32 %v563, %v485
    %v572 = vmul.f32 %v564, %v492
    %v573 = vmul.f32 %v565, %v499
    %v574 = vmul.f32 %v566, %v506
    %v575 = vmul.f32 %v567, %v513
    %v576 = vmul.f32 %v568, %v520
    %v577 = vadd.f32 %v569, 4.3746643
    %v578 = vadd.f32 %v570, 4.3746643
    %v579 = vadd.f32 %v571, 4.3746643
    %v580 = vadd.f32 %v572, 4.3746643
    %v581 = vadd.f32 %v573, 4.3746643
    %v582 = vadd.f32 %v574, 4.3746643
    %v583 = vadd.f32 %v575, 4.3746643
    %v584 = vadd.f32 %v576, 4.3746643
    %v585 = vmul.f32 %v577, %v471
    %v586 = vmul.f32 %v578, %v478
    %v587 = vmul.f32 %v579, %v485
    %v588 = vmul.f32 %v580, %v492
    %v589 = vmul.f32 %v581, %v499
    %v590 = vmul.f32 %v582, %v506
    %v591 = vmul.f32 %v583, %v513
    %v592 = vmul.f32 %v584, %v520
    %v593 = vadd.f32 %v585, 2.938164
    %v594 = vadd.f32 %v586, 2.938164
    %v595 = vadd.f32 %v587, 2.938164
    %v596 = vadd.f32 %v588, 2.938164
    %v597 = vadd.f32 %v589, 2.938164
    %v598 = vadd.f32 %v590, 2.938164
    %v599 = vadd.f32 %v591, 2.938164
    %v600 = vadd.f32 %v592, 2.938164
    %v601 = vmul.f32 %v471, 0.007784696
    %v602 = vmul.f32 %v478, 0.007784696
    %v603 = vmul.f32 %v485, 0.007784696
    %v604 = vmul.f32 %v492, 0.007784696
    %v605 = vmul.f32 %v499, 0.007784696
    %v606 = vmul.f32 %v506, 0.007784696
    %v607 = vmul.f32 %v513, 0.007784696
    %v608 = vmul.f32 %v520, 0.007784696
    %v609 = vadd.f32 %v601, 0.32246712
    %v610 = vadd.f32 %v602, 0.32246712
    %v611 = vadd.f32 %v603, 0.32246712
    %v612 = vadd.f32 %v604, 0.32246712
    %v613 = vadd.f32 %v605, 0.32246712
    %v614 = vadd.f32 %v606, 0.32246712
    %v615 = vadd.f32 %v607, 0.32246712
    %v616 = vadd.f32 %v608, 0.32246712
    %v617 = vmul.f32 %v609, %v471
    %v618 = vmul.f32 %v610, %v478
    %v619 = vmul.f32 %v611, %v485
    %v620 = vmul.f32 %v612, %v492
    %v621 = vmul.f32 %v613, %v499
    %v622 = vmul.f32 %v614, %v506
    %v623 = vmul.f32 %v615, %v513
    %v624 = vmul.f32 %v616, %v520
    %v625 = vadd.f32 %v617, 2.4451342
    %v626 = vadd.f32 %v618, 2.4451342
    %v627 = vadd.f32 %v619, 2.4451342
    %v628 = vadd.f32 %v620, 2.4451342
    %v629 = vadd.f32 %v621, 2.4451342
    %v630 = vadd.f32 %v622, 2.4451342
    %v631 = vadd.f32 %v623, 2.4451342
    %v632 = vadd.f32 %v624, 2.4451342
    %v633 = vmul.f32 %v625, %v471
    %v634 = vmul.f32 %v626, %v478
    %v635 = vmul.f32 %v627, %v485
    %v636 = vmul.f32 %v628, %v492
    %v637 = vmul.f32 %v629, %v499
    %v638 = vmul.f32 %v630, %v506
    %v639 = vmul.f32 %v631, %v513
    %v640 = vmul.f32 %v632, %v520
    %v641 = vadd.f32 %v633, 3.7544086
    %v642 = vadd.f32 %v634, 3.7544086
    %v643 = vadd.f32 %v635, 3.7544086
    %v644 = vadd.f32 %v636, 3.7544086
    %v645 = vadd.f32 %v637, 3.7544086
    %v646 = vadd.f32 %v638, 3.7544086
    %v647 = vadd.f32 %v639, 3.7544086
    %v648 = vadd.f32 %v640, 3.7544086
    %v649 = vmul.f32 %v641, %v471
    %v650 = vmul.f32 %v642, %v478
    %v651 = vmul.f32 %v643, %v485
    %v652 = vmul.f32 %v644, %v492
    %v653 = vmul.f32 %v645, %v499
    %v654 = vmul.f32 %v646, %v506
    %v655 = vmul.f32 %v647, %v513
    %v656 = vmul.f32 %v648, %v520
    %v657 = vadd.f32 %v649, 1.0
    %v658 = vadd.f32 %v650, 1.0
    %v659 = vadd.f32 %v651, 1.0
    %v660 = vadd.f32 %v652, 1.0
    %v661 = vadd.f32 %v653, 1.0
    %v662 = vadd.f32 %v654, 1.0
    %v663 = vadd.f32 %v655, 1.0
    %v664 = vadd.f32 %v656, 1.0
    %v665 = vrcp.pop %v657
    %v666 = vmul.f32 %v593, %v665
    %v667 = vrcp.pop %v658
    %v668 = vmul.f32 %v594, %v667
    %v669 = vrcp.pop %v659
    %v670 = vmul.f32 %v595, %v669
    %v671 = vrcp.pop %v660
    %v672 = vmul.f32 %v596, %v671
    %v673 = vrcp.pop %v661
    %v674 = vmul.f32 %v597, %v673
    %v675 = vrcp.pop %v662
    %v676 = vmul.f32 %v598, %v675
    %v677 = vrcp.pop %v663
    %v678 = vmul.f32 %v599, %v677
    %v679 = vrcp.pop %v664
    %v680 = vmul.f32 %v600, %v679
    %vm681 = vcmp.lt.f32.partialorder %v217, 0.5
    %vm682 = vcmp.lt.f32.partialorder %v218, 0.5
    %vm683 = vcmp.lt.f32.partialorder %v219, 0.5
    %vm684 = vcmp.lt.f32.partialorder %v220, 0.5
    %vm685 = vcmp.lt.f32.partialorder %v221, 0.5
    %vm686 = vcmp.lt.f32.partialorder %v222, 0.5
    %vm687 = vcmp.lt.f32.partialorder %v223, 0.5
    %vm688 = vcmp.lt.f32.partialorder %v224, 0.5
    %v689 = vsub.f32 0.0, %v666
    %v690 = vsub.f32 0.0, %v668
    %v691 = vsub.f32 0.0, %v670
    %v692 = vsub.f32 0.0, %v672
    %v693 = vsub.f32 0.0, %v674
    %v694 = vsub.f32 0.0, %v676
    %v695 = vsub.f32 0.0, %v678
    %v696 = vsub.f32 0.0, %v680
    %v697 = vsel %vm681, %v666, %v689
    %v698 = vsel %vm682, %v668, %v690
    %v699 = vsel %vm683, %v670, %v691
    %v700 = vsel %vm684, %v672, %v692
    %v701 = vsel %vm685, %v674, %v693
    %v702 = vsel %vm686, %v676, %v694
    %v703 = vsel %vm687, %v678, %v695
    %v704 = vsel %vm688, %v680, %v696
    %vm705 = vcmp.lt.f32.partialorder %v433, 0.02425
    %vm706 = vcmp.lt.f32.partialorder %v434, 0.02425
    %vm707 = vcmp.lt.f32.partialorder %v435, 0.02425
    %vm708 = vcmp.lt.f32.partialorder %v436, 0.02425
    %vm709 = vcmp.lt.f32.partialorder %v437, 0.02425
    %vm710 = vcmp.lt.f32.partialorder %v438, 0.02425
    %vm711 = vcmp.lt.f32.partialorder %v439, 0.02425
    %vm712 = vcmp.lt.f32.partialorder %v440, 0.02425
    %v713 = vsel %vm705, %v697, %v410
    %v714 = vsel %vm706, %v698, %v412
    %v715 = vsel %vm707, %v699, %v414
    %v716 = vsel %vm708, %v700, %v416
    %v717 = vsel %vm709, %v701, %v418
    %v718 = vsel %vm710, %v702, %v420
    %v719 = vsel %vm711, %v703, %v422
    %v720 = vsel %vm712, %v704, %v424
    %v721 = vld [vmem:[#allocation4] sm:$0xff]
    %v722 = vld [vmem:[#allocation4 + $0x8] sm:$0xff]
    %v723 = vld [vmem:[#allocation4 + $0x10] sm:$0xff]
    %v724 = vld [vmem:[#allocation4 + $0x18] sm:$0xff]
    %v725 = vld [vmem:[#allocation4 + $0x20] sm:$0xff]
    %v726 = vld [vmem:[#allocation4 + $0x28] sm:$0xff]
    %v727 = vld [vmem:[#allocation4 + $0x30] sm:$0xff]
    %v728 = vld [vmem:[#allocation4 + $0x38] sm:$0xff]
    %v729 = vadd.f32 %v713, 1.0
    %v730 = vadd.f32 %v714, 1.0
    %v731 = vadd.f32 %v715, 1.0
    %v732 = vadd.f32 %v716, 1.0
    %v733 = vadd.f32 %v717, 1.0
    %v734 = vadd.f32 %v718, 1.0
    %v735 = vadd.f32 %v719, 1.0
    %v736 = vadd.f32 %v720, 1.0
    %v737 = vmul.f32 %v721, %v729
    %v738 = vmul.f32 %v722, %v730
    %v739 = vmul.f32 %v723, %v731
    %v740 = vmul.f32 %v724, %v732
    %v741 = vmul.f32 %v725, %v733
    %v742 = vmul.f32 %v726, %v734
    %v743 = vmul.f32 %v727, %v735
    %v744 = vmul.f32 %v728, %v736
    %745 = vst [vmem:[#allocation7] sm:$0xff] %v737
    %746 = vst [vmem:[#allocation7 + $0x8] sm:$0xff] %v738
    %747 = vst [vmem:[#allocation7 + $0x10] sm:$0xff] %v739
    %748 = vst [vmem:[#allocation7 + $0x18] sm:$0xff] %v740
    %749 = vst [vmem:[#allocation7 + $0x20] sm:$0xff] %v741
    %750 = vst [vmem:[#allocation7 + $0x28] sm:$0xff] %v742
    %751 = vst [vmem:[#allocation7 + $0x30] sm:$0xff] %v743
    %752 = vst [vmem:[#allocation7 + $0x38] sm:$0xff] %v744
    // Predicated region
    $region10: #{tpu_custom_call.1} parent=1 // pred_check
      _
    $region11: #{tpu_custom_call.1} parent=1 // pred_check_branch
      %754 = sbr.rel (0) target = $region13
    $region12: #{tpu_custom_call.1} parent=1 // pred_region
      %s756 = ssub.s32 1024, 1024
      %757 = vsyncadd [#allocation6], %s756
      %s759 = sshll.u32 [#allocation7], 4
      %s760 = int_to_ptr.vmem [resolvable:$true] %s759
      %762 = dma.vmem_to_hbm [thread:$0]  %s760, 1024, %s2, [#allocation6]
    $region13: #{tpu_custom_call.1} parent=1 // pred_fallthru
      _
    // Predicated region
    $region14: #{tpu_custom_call.1} parent=1 // pred_check
      _
    $region15: #{tpu_custom_call.1} parent=1 // pred_check_branch
      %764 = sbr.rel (0) target = $region17
    $region16: #{tpu_custom_call.1} parent=1 // pred_region
      %765 = dma.done [#allocation6], 1024
    $region17: #{tpu_custom_call.1} parent=1 // pred_fallthru
      _
    %766 = vsyncpa [#allocation5], 1
    %767 = vsyncpa [#allocation6], 1

</llo_original>
